<compile_context>
chip_gen: v5e
topology: v5e:2x2
jax: 0.10.0
libtpu: 0.0.40
codegen_flags: <defaults>
</compile_context>

<pallas_src>
import math

import jax
import jax.numpy as jnp
from jax.experimental import pallas as pl
from jax.experimental.pallas import tpu as pltpu


def _noisy_linear_kernel(x_ref, wmu_ref, wsig_ref, bmu_ref, bsig_ref,
                         epsi_ref, epso_ref, o_ref, acc_ref):
    """One (n, k) grid step.

    x_ref    : (B, TK)      input tile (all rows, K-slice k)
    wmu_ref  : (TK, TN)     weight_mu^T tile
    wsig_ref : (TK, TN)     weight_sigma^T tile
    bmu_ref  : (1, TN)      bias_mu slice
    bsig_ref : (1, TN)      bias_sigma slice
    epsi_ref : (1, TK)      eps_in slice
    epso_ref : (1, TN)      eps_out slice
    o_ref    : (B, TN)      output tile (resident across the K axis)
    acc_ref  : (B, TN) f32  VMEM accumulator scratch
    """
    k = pl.program_id(1)

    @pl.when(k == 0)
    def _():
        acc_ref[...] = jnp.zeros_like(acc_ref)

    x = x_ref[...]                               # (B, TK)
    x_noisy = x * epsi_ref[...]                  # row-broadcast eps_in over batch

    # y_tile += x @ Wmu^T_tile + eps_out * ((x*eps_in) @ Wsig^T_tile)
    acc_ref[...] += (
        jnp.dot(x, wmu_ref[...], preferred_element_type=jnp.float32)
        + epso_ref[...] * jnp.dot(x_noisy, wsig_ref[...],
                                  preferred_element_type=jnp.float32)
    )

    @pl.when(k == pl.num_programs(1) - 1)
    def _():
        bias = bmu_ref[...] + bsig_ref[...] * epso_ref[...]   # (1, TN)
        o_ref[...] = (acc_ref[...] + bias).astype(o_ref.dtype)


def _round_up(x, m):
    return ((x + m - 1) // m) * m


def noisy_linear_forward(x, weight_mu, weight_sigma, bias_mu, bias_sigma,
                         eps_in, eps_out, *, tile_n=512, tile_k=512):
    """x: (B, in_dim) f32, weights in torch (out_dim, in_dim) layout.

    Returns (B, out_dim) f32, identical semantics to the training-mode
    NoisyLinear forward (F.linear with W = mu + sigma*outer(eps_out, eps_in)).
    """
    B, in_dim = x.shape
    out_dim = weight_mu.shape[0]

    # Lane-aligned tile sizes; shrink for small layers, cap for VMEM on v7x.
    tn = min(tile_n, _round_up(out_dim, 128))
    tk = min(tile_k, _round_up(in_dim, 128))
    n_pad = _round_up(out_dim, tn)
    k_pad = _round_up(in_dim, tk)
    b_pad = _round_up(B, 8)

    f32 = jnp.float32
    # (K, N) weight layout for a natural (B,K)@(K,N) MXU feed. Zero padding is
    # inert: padded K columns of x are zero; padded N columns are sliced off.
    wmu_t = jnp.zeros((k_pad, n_pad), f32).at[:in_dim, :out_dim].set(weight_mu.T)
    wsig_t = jnp.zeros((k_pad, n_pad), f32).at[:in_dim, :out_dim].set(weight_sigma.T)
    x_p = jnp.zeros((b_pad, k_pad), f32).at[:B, :in_dim].set(x)
    bmu_row = jnp.zeros((1, n_pad), f32).at[0, :out_dim].set(bias_mu)
    bsig_row = jnp.zeros((1, n_pad), f32).at[0, :out_dim].set(bias_sigma)
    epsi_row = jnp.zeros((1, k_pad), f32).at[0, :in_dim].set(eps_in)
    epso_row = jnp.zeros((1, n_pad), f32).at[0, :out_dim].set(eps_out)

    grid = (n_pad // tn, k_pad // tk)

    # TODO(synk): bf16 weight storage (cast tiles before the dot, f32 accumulate)
    # would ~halve HBM traffic for large layers, but is skipped here to keep
    # bit-tight agreement with the f32 reference.
    out = pl.pallas_call(
        _noisy_linear_kernel,
        out_shape=jax.ShapeDtypeStruct((b_pad, n_pad), f32),
        grid_spec=pltpu.PrefetchScalarGridSpec(
            num_scalar_prefetch=0,
            grid=grid,
            in_specs=[
                pl.BlockSpec((b_pad, tk), lambda i, k: (0, k)),   # x
                pl.BlockSpec((tk, tn),    lambda i, k: (k, i)),   # weight_mu^T
                pl.BlockSpec((tk, tn),    lambda i, k: (k, i)),   # weight_sigma^T
                pl.BlockSpec((1, tn),     lambda i, k: (0, i)),   # bias_mu
                pl.BlockSpec((1, tn),     lambda i, k: (0, i)),   # bias_sigma
                pl.BlockSpec((1, tk),     lambda i, k: (0, k)),   # eps_in
                pl.BlockSpec((1, tn),     lambda i, k: (0, i)),   # eps_out
            ],
            out_specs=pl.BlockSpec((b_pad, tn), lambda i, k: (0, i)),
            scratch_shapes=[pltpu.VMEM((b_pad, tn), jnp.float32)],
        ),
        compiler_params=pltpu.CompilerParams(
            dimension_semantics=("parallel", "arbitrary")),
    )(x_p, wmu_t, wsig_t, bmu_row, bsig_row, epsi_row, epso_row)

    return out[:B, :out_dim]


def scale_noise(key, size):
    """f(x) = sign(x) * sqrt(|x|) applied to standard normal samples."""
    g = jax.random.normal(key, (size,), dtype=jnp.float32)
    return jnp.sign(g) * jnp.sqrt(jnp.abs(g))


def init_noisy_linear_params(key, in_dim, out_dim, sigma_init=0.05):
    """Deterministic re-implementation of NoisyLinear.reset_parameters()."""
    k_wmu, k_bmu = jax.random.split(key)
    mu_range = 1.0 / math.sqrt(in_dim)
    weight_mu = jax.random.uniform(k_wmu, (out_dim, in_dim), jnp.float32,
                                   minval=-mu_range, maxval=mu_range)
    bias_mu = jax.random.uniform(k_bmu, (out_dim,), jnp.float32,
                                 minval=-mu_range, maxval=mu_range)
    weight_sigma = jnp.full((out_dim, in_dim), sigma_init / math.sqrt(in_dim),
                            dtype=jnp.float32)
    bias_sigma = jnp.full((out_dim,), sigma_init / math.sqrt(out_dim),
                          dtype=jnp.float32)
    return weight_mu, weight_sigma, bias_mu, bias_sigma


if __name__ == "__main__":
    key = jax.random.PRNGKey(0)
    k_param, k_x, k_eps_i, k_eps_j = jax.random.split(key, 4)

    B, in_dim, out_dim = 8, 32, 32
    weight_mu, weight_sigma, bias_mu, bias_sigma = init_noisy_linear_params(
        k_param, in_dim, out_dim, sigma_init=0.05)

    x = jax.random.normal(k_x, (B, in_dim), dtype=jnp.float32)

    # Training-mode forward: reset_noise() then apply noisy weights + bias.
    eps_in = scale_noise(k_eps_i, in_dim)
    eps_out = scale_noise(k_eps_j, out_dim)

    y = noisy_linear_forward(x, weight_mu, weight_sigma, bias_mu, bias_sigma,
                             eps_in, eps_out)
    y = jax.block_until_ready(y)

    # Pure-JAX reference check (same semantics as F.linear with noisy params).
    w_ref = weight_mu + weight_sigma * jnp.outer(eps_out, eps_in)
    b_ref = bias_mu + bias_sigma * eps_out
    y_ref = x @ w_ref.T + b_ref
    assert y.shape == (B, out_dim)
    assert jnp.allclose(y, y_ref, atol=1e-4, rtol=1e-4), "mismatch vs reference"

    print("KERNEL_OK")
</pallas_src>

<mosaic_0001>
module attributes {stable_mosaic.version = 11 : i64} {
  func.func @_noisy_linear_kernel(%arg0: i32, %arg1: i32, %arg2: memref<8x128xf32, #tpu.memory_space<vmem>>, %arg3: memref<128x128xf32, #tpu.memory_space<vmem>>, %arg4: memref<128x128xf32, #tpu.memory_space<vmem>>, %arg5: memref<1x128xf32, #tpu.memory_space<vmem>>, %arg6: memref<1x128xf32, #tpu.memory_space<vmem>>, %arg7: memref<1x128xf32, #tpu.memory_space<vmem>>, %arg8: memref<1x128xf32, #tpu.memory_space<vmem>>, %arg9: memref<8x128xf32, #tpu.memory_space<vmem>>, %arg10: memref<8x128xf32, #tpu.memory_space<vmem>>) attributes {dimension_semantics = [#tpu.dimension_semantics<parallel>, #tpu.dimension_semantics<arbitrary>], iteration_bounds = array<i64: 1, 1>, scalar_prefetch = 0 : i64, scratch_operands = 1 : i64, tpu.core_type = #tpu.core_type<tc>, window_params = [{transform_indices = @transform_0, window_bounds = array<i64: 8, 128>}, {transform_indices = @transform_1, window_bounds = array<i64: 128, 128>}, {transform_indices = @transform_2, window_bounds = array<i64: 128, 128>}, {transform_indices = @transform_3, window_bounds = array<i64: 1, 128>}, {transform_indices = @transform_4, window_bounds = array<i64: 1, 128>}, {transform_indices = @transform_5, window_bounds = array<i64: 1, 128>}, {transform_indices = @transform_6, window_bounds = array<i64: 1, 128>}, {transform_indices = @transform_7, window_bounds = array<i64: 8, 128>}]} {
    %c0_i32 = arith.constant 0 : i32
    %0 = arith.cmpi eq, %arg1, %c0_i32 : i32
    %1 = arith.extui %0 : i1 to i32
    %c0_i32_0 = arith.constant 0 : i32
    %2 = arith.cmpi ne, %1, %c0_i32_0 : i32
    scf.if %2 {
      %cst_17 = arith.constant 0.000000e+00 : f32
      %21 = vector.broadcast %cst_17 : f32 to vector<8x128xf32>
      %c0_18 = arith.constant 0 : index
      %c0_19 = arith.constant 0 : index
      %22 = vector.load %arg10[%c0_18, %c0_19] : memref<8x128xf32, #tpu.memory_space<vmem>>, vector<8x128xf32>
      tpu.vector_store %arg10[%c0_18, %c0_19], %21 {strides = array<i32>} : memref<8x128xf32, #tpu.memory_space<vmem>>, vector<8x128xf32>,
    } else {
    }
    %c0 = arith.constant 0 : index
    %c0_1 = arith.constant 0 : index
    %3 = vector.load %arg2[%c0, %c0_1] : memref<8x128xf32, #tpu.memory_space<vmem>>, vector<8x128xf32>
    %c0_2 = arith.constant 0 : index
    %c0_3 = arith.constant 0 : index
    %4 = vector.load %arg7[%c0_2, %c0_3] : memref<1x128xf32, #tpu.memory_space<vmem>>, vector<1x128xf32>
    %5 = vector.broadcast %4 : vector<1x128xf32> to vector<8x128xf32>
    %6 = arith.mulf %3, %5 : vector<8x128xf32>
    %c0_4 = arith.constant 0 : index
    %c0_5 = arith.constant 0 : index
    %7 = vector.load %arg10[%c0_4, %c0_5] : memref<8x128xf32, #tpu.memory_space<vmem>>, vector<8x128xf32>
    %c0_6 = arith.constant 0 : index
    %c0_7 = arith.constant 0 : index
    %8 = vector.load %arg3[%c0_6, %c0_7] : memref<128x128xf32, #tpu.memory_space<vmem>>, vector<128x128xf32>
    %cst = arith.constant dense<0.000000e+00> : vector<8x128xf32>
    %9 = tpu.matmul %3, %8, %cst {dimension_numbers = #tpu.dot_dimension_numbers<[1], [0], [0], [1], [0, 0, 1, 1], [], []>} : vector<8x128xf32>, vector<128x128xf32>, vector<8x128xf32> -> vector<8x128xf32>
    %c0_8 = arith.constant 0 : index
    %c0_9 = arith.constant 0 : index
    %10 = vector.load %arg8[%c0_8, %c0_9] : memref<1x128xf32, #tpu.memory_space<vmem>>, vector<1x128xf32>
    %c0_10 = arith.constant 0 : index
    %c0_11 = arith.constant 0 : index
    %11 = vector.load %arg4[%c0_10, %c0_11] : memref<128x128xf32, #tpu.memory_space<vmem>>, vector<128x128xf32>
    %cst_12 = arith.constant dense<0.000000e+00> : vector<8x128xf32>
    %12 = tpu.matmul %6, %11, %cst_12 {dimension_numbers = #tpu.dot_dimension_numbers<[1], [0], [0], [1], [0, 0, 1, 1], [], []>} : vector<8x128xf32>, vector<128x128xf32>, vector<8x128xf32> -> vector<8x128xf32>
    %13 = vector.broadcast %10 : vector<1x128xf32> to vector<8x128xf32>
    %14 = arith.mulf %13, %12 : vector<8x128xf32>
    %15 = arith.addf %9, %14 : vector<8x128xf32>
    %16 = arith.addf %7, %15 : vector<8x128xf32>
    %c0_13 = arith.constant 0 : index
    %c0_14 = arith.constant 0 : index
    %17 = vector.load %arg10[%c0_13, %c0_14] : memref<8x128xf32, #tpu.memory_space<vmem>>, vector<8x128xf32>
    tpu.vector_store %arg10[%c0_13, %c0_14], %16 {strides = array<i32>} : memref<8x128xf32, #tpu.memory_space<vmem>>, vector<8x128xf32>,
    %c0_i32_15 = arith.constant 0 : i32
    %18 = arith.cmpi eq, %arg1, %c0_i32_15 : i32
    %19 = arith.extui %18 : i1 to i32
    %c0_i32_16 = arith.constant 0 : i32
    %20 = arith.cmpi ne, %19, %c0_i32_16 : i32
    scf.if %20 {
      %c0_17 = arith.constant 0 : index
      %c0_18 = arith.constant 0 : index
      %21 = vector.load %arg5[%c0_17, %c0_18] : memref<1x128xf32, #tpu.memory_space<vmem>>, vector<1x128xf32>
      %c0_19 = arith.constant 0 : index
      %c0_20 = arith.constant 0 : index
      %22 = vector.load %arg6[%c0_19, %c0_20] : memref<1x128xf32, #tpu.memory_space<vmem>>, vector<1x128xf32>
      %c0_21 = arith.constant 0 : index
      %c0_22 = arith.constant 0 : index
      %23 = vector.load %arg8[%c0_21, %c0_22] : memref<1x128xf32, #tpu.memory_space<vmem>>, vector<1x128xf32>
      %24 = arith.mulf %22, %23 : vector<1x128xf32>
      %25 = arith.addf %21, %24 : vector<1x128xf32>
      %c0_23 = arith.constant 0 : index
      %c0_24 = arith.constant 0 : index
      %26 = vector.load %arg10[%c0_23, %c0_24] : memref<8x128xf32, #tpu.memory_space<vmem>>, vector<8x128xf32>
      %27 = vector.broadcast %25 : vector<1x128xf32> to vector<8x128xf32>
      %28 = arith.addf %26, %27 : vector<8x128xf32>
      %c0_25 = arith.constant 0 : index
      %c0_26 = arith.constant 0 : index
      %29 = vector.load %arg9[%c0_25, %c0_26] : memref<8x128xf32, #tpu.memory_space<vmem>>, vector<8x128xf32>
      tpu.vector_store %arg9[%c0_25, %c0_26], %28 {strides = array<i32>} : memref<8x128xf32, #tpu.memory_space<vmem>>, vector<8x128xf32>,
    } else {
    }
    return
  }
  func.func @transform_0(%arg0: i32, %arg1: i32) -> (i32, i32) {
    %c0_i32 = arith.constant 0 : i32
    %c0_i32_0 = arith.constant 0 : i32
    return %c0_i32, %arg1 : i32, i32
  }
  func.func @transform_1(%arg0: i32, %arg1: i32) -> (i32, i32) {
    %c0_i32 = arith.constant 0 : i32
    return %arg1, %arg0 : i32, i32
  }
  func.func @transform_2(%arg0: i32, %arg1: i32) -> (i32, i32) {
    %c0_i32 = arith.constant 0 : i32
    return %arg1, %arg0 : i32, i32
  }
  func.func @transform_3(%arg0: i32, %arg1: i32) -> (i32, i32) {
    %c0_i32 = arith.constant 0 : i32
    %c0_i32_0 = arith.constant 0 : i32
    return %c0_i32, %arg0 : i32, i32
  }
  func.func @transform_4(%arg0: i32, %arg1: i32) -> (i32, i32) {
    %c0_i32 = arith.constant 0 : i32
    %c0_i32_0 = arith.constant 0 : i32
    return %c0_i32, %arg0 : i32, i32
  }
  func.func @transform_5(%arg0: i32, %arg1: i32) -> (i32, i32) {
    %c0_i32 = arith.constant 0 : i32
    %c0_i32_0 = arith.constant 0 : i32
    return %c0_i32, %arg1 : i32, i32
  }
  func.func @transform_6(%arg0: i32, %arg1: i32) -> (i32, i32) {
    %c0_i32 = arith.constant 0 : i32
    %c0_i32_0 = arith.constant 0 : i32
    return %c0_i32, %arg0 : i32, i32
  }
  func.func @transform_7(%arg0: i32, %arg1: i32) -> (i32, i32) {
    %c0_i32 = arith.constant 0 : i32
    %c0_i32_0 = arith.constant 0 : i32
    return %c0_i32, %arg0 : i32, i32
  }
}

</mosaic_0001>

<llo_original>
// kernel: tpu_custom_call.1
$region0: #{tpu_custom_call.1}
  #allocation0 [shape = 'u32[]', space=smem, size = 0x4, offset = 0x4, fixed_abs, tag = 'smem constant byte address 0x4 - core index']
  #allocation1 [shape = 'u32[72,128]{1,0:T(1,128)}', space=vmem, size = 0x9000, scoped, tag = 'internal scratch']
  #allocation2 [shape = 'f32[8,128]{1,0:T(8,128)}', space=vmem, size = 0x1000, scoped, tag = 'scratch operand']
  %s0 = inlined_call_operand.hbm [shape: f32[8,128], index: 0, kind: input, shape index: {}]
  %s1 = inlined_call_operand.hbm [shape: f32[128,128], index: 1, kind: input, shape index: {}]
  %s2 = inlined_call_operand.hbm [shape: f32[128,128], index: 2, kind: input, shape index: {}]
  %s3 = inlined_call_operand.vmem [shape: f32[1,128], index: 3, kind: input, shape index: {}]
  %s4 = inlined_call_operand.vmem [shape: f32[1,128], index: 4, kind: input, shape index: {}]
  %s5 = inlined_call_operand.vmem [shape: f32[1,128], index: 5, kind: input, shape index: {}]
  %s6 = inlined_call_operand.vmem [shape: f32[1,128], index: 6, kind: input, shape index: {}]
  %s7 = inlined_call_operand.hbm [shape: f32[8,128], index: 7, kind: output, shape index: {}]
  %s8 = sld [smem:[#allocation0]]
  $region58: #{tpu_custom_call.1} parent=0
    _
  %s10 = ssub.s32 1, %s8
  %s11 = scalar_select 0, %s10, %s8
  $region1: #{tpu_custom_call.1} parent=0
    #allocation3 [shape = 'u8[4096]{0}', space=vmem, size = 0x1000, scoped, tag = 'input window, operand 0, single buffered']
    #allocation4 [shape = 's32[1]{0}', space=sflag, size = 0x4, scoped, tag = 'scoped memory for tpu_custom_call.1']
    #allocation5 [shape = 's32[1]{0}', space=sflag, size = 0x4, scoped, tag = 'scoped memory for tpu_custom_call.1']
    #allocation6 [shape = 'u8[65536]{0}', space=vmem, size = 0x10000, scoped, tag = 'input window, operand 1, single buffered']
    #allocation7 [shape = 's32[1]{0}', space=sflag, size = 0x4, scoped, tag = 'scoped memory for tpu_custom_call.1']
    #allocation8 [shape = 'u8[65536]{0}', space=vmem, size = 0x10000, scoped, tag = 'input window, operand 2, single buffered']
    #allocation9 [shape = 'u8[4096]{0}', space=vmem, size = 0x1000, scoped, tag = 'output window, operand 0, single buffered']
    %12 = vsyncpa [#allocation4], 0
    %13 = vsyncpa [#allocation7], 0
    %14 = vsyncpa [#allocation5], 0
    // Predicated region
    $region2: #{tpu_custom_call.1} parent=1 // pred_check
      _
    $region3: #{tpu_custom_call.1} parent=1 // pred_check_branch
      %16 = sbr.rel (0) target = $region5
    $region4: #{tpu_custom_call.1} parent=1 // pred_region
      %18 = vsyncadd [#allocation4], 0
      %s20 = sshll.u32 %s0, 4
      %s21 = int_to_ptr.hbm [resolvable:$true] %s20
      %s22 = sshll.u32 [#allocation3], 4
      %s23 = int_to_ptr.vmem [resolvable:$true] %s22
      %25 = dma.hbm_to_vmem [thread:$0]  %s21, 128, %s23, [#allocation4]
    $region5: #{tpu_custom_call.1} parent=1 // pred_fallthru
      _
    // Predicated region
    $region6: #{tpu_custom_call.1} parent=1 // pred_check
      _
    $region7: #{tpu_custom_call.1} parent=1 // pred_check_branch
      %27 = sbr.rel (0) target = $region9
    $region8: #{tpu_custom_call.1} parent=1 // pred_region
      %29 = vsyncadd [#allocation7], 0
      %s30 = sshll.u32 %s1, 4
      %s31 = int_to_ptr.hbm [resolvable:$true] %s30
      %s32 = sshll.u32 [#allocation6], 4
      %s33 = int_to_ptr.vmem [resolvable:$true] %s32
      %38 = dma.hbm_to_vmem [thread:$0]  %s31, 2048, %s33, [#allocation7], 128, 128, 8
    $region9: #{tpu_custom_call.1} parent=1 // pred_fallthru
      _
    // Predicated region
    $region10: #{tpu_custom_call.1} parent=1 // pred_check
      _
    $region11: #{tpu_custom_call.1} parent=1 // pred_check_branch
      %40 = sbr.rel (0) target = $region13
    $region12: #{tpu_custom_call.1} parent=1 // pred_region
      %42 = vsyncadd [#allocation7], 0
      %s43 = sshll.u32 %s2, 4
      %s44 = int_to_ptr.hbm [resolvable:$true] %s43
      %s45 = sshll.u32 [#allocation8], 4
      %s46 = int_to_ptr.vmem [resolvable:$true] %s45
      %51 = dma.hbm_to_vmem [thread:$0]  %s44, 2048, %s46, [#allocation7], 128, 128, 8
    $region13: #{tpu_custom_call.1} parent=1 // pred_fallthru
      _
    // Predicated region
    $region14: #{tpu_custom_call.1} parent=1 // pred_check
      _
    $region15: #{tpu_custom_call.1} parent=1 // pred_check_branch
      %53 = sbr.rel (0) target = $region17
    $region16: #{tpu_custom_call.1} parent=1 // pred_region
      _
    $region17: #{tpu_custom_call.1} parent=1 // pred_fallthru
      _
    // Predicated region
    $region18: #{tpu_custom_call.1} parent=1 // pred_check
      _
    $region19: #{tpu_custom_call.1} parent=1 // pred_check_branch
      %55 = sbr.rel (0) target = $region21
    $region20: #{tpu_custom_call.1} parent=1 // pred_region
      _
    $region21: #{tpu_custom_call.1} parent=1 // pred_fallthru
      _
    // Predicated region
    $region22: #{tpu_custom_call.1} parent=1 // pred_check
      _
    $region23: #{tpu_custom_call.1} parent=1 // pred_check_branch
      %57 = sbr.rel (0) target = $region25
    $region24: #{tpu_custom_call.1} parent=1 // pred_region
      _
    $region25: #{tpu_custom_call.1} parent=1 // pred_fallthru
      _
    // Predicated region
    $region26: #{tpu_custom_call.1} parent=1 // pred_check
      _
    $region27: #{tpu_custom_call.1} parent=1 // pred_check_branch
      %59 = sbr.rel (0) target = $region29
    $region28: #{tpu_custom_call.1} parent=1 // pred_region
      _
    $region29: #{tpu_custom_call.1} parent=1 // pred_fallthru
      _
    // Predicated region
    $region30: #{tpu_custom_call.1} parent=1 // pred_check
      _
    $region31: #{tpu_custom_call.1} parent=1 // pred_check_branch
      %61 = sbr.rel (0) target = $region33
    $region32: #{tpu_custom_call.1} parent=1 // pred_region
      %63 = dma.done [#allocation4], 128
    $region33: #{tpu_custom_call.1} parent=1 // pred_fallthru
      _
    // Predicated region
    $region34: #{tpu_custom_call.1} parent=1 // pred_check
      _
    $region35: #{tpu_custom_call.1} parent=1 // pred_check_branch
      %65 = sbr.rel (0) target = $region37
    $region36: #{tpu_custom_call.1} parent=1 // pred_region
      %67 = dma.done [#allocation7], 2048
    $region37: #{tpu_custom_call.1} parent=1 // pred_fallthru
      _
    // Predicated region
    $region38: #{tpu_custom_call.1} parent=1 // pred_check
      _
    $region39: #{tpu_custom_call.1} parent=1 // pred_check_branch
      %69 = sbr.rel (0) target = $region41
    $region40: #{tpu_custom_call.1} parent=1 // pred_region
      %71 = dma.done [#allocation7], 2048
    $region41: #{tpu_custom_call.1} parent=1 // pred_fallthru
      _
    %p72 = scmp.eq.s32.totalorder 0, 0
    // Predicated region
    $region42: #{tpu_custom_call.1} parent=1 // pred_check
      %p73 = pneg %p72
    $region43: #{tpu_custom_call.1} parent=1 // pred_check_branch
      %75 = sbr.rel (%p73) target = $region45
    $region44: #{tpu_custom_call.1} parent=1 // pred_region
      %76 = vst [vmem:[#allocation2] sm:$0xff] 0.0
    $region45: #{tpu_custom_call.1} parent=1 // pred_fallthru
      _
    %v77 = vld [vmem:[#allocation3] sm:$0xff]
    %v78 = vld [vmem:[%s5] sm:$0x1]
    %v80 = vperm.slane %v78, 0
    %v82 = vmul.f32 %v77, %v80
    %v83 = vld [vmem:[#allocation2] sm:$0xff]
    %v84 = vld [vmem:[#allocation6] sm:$0xff]
    %v85 = vld [vmem:[#allocation6 + $0x8] sm:$0xff]
    %v86 = vld [vmem:[#allocation6 + $0x10] sm:$0xff]
    %v87 = vld [vmem:[#allocation6 + $0x18] sm:$0xff]
    %v88 = vld [vmem:[#allocation6 + $0x20] sm:$0xff]
    %v89 = vld [vmem:[#allocation6 + $0x28] sm:$0xff]
    %v90 = vld [vmem:[#allocation6 + $0x30] sm:$0xff]
    %v91 = vld [vmem:[#allocation6 + $0x38] sm:$0xff]
    %v92 = vld [vmem:[#allocation6 + $0x40] sm:$0xff]
    %v93 = vld [vmem:[#allocation6 + $0x48] sm:$0xff]
    %v94 = vld [vmem:[#allocation6 + $0x50] sm:$0xff]
    %v95 = vld [vmem:[#allocation6 + $0x58] sm:$0xff]
    %v96 = vld [vmem:[#allocation6 + $0x60] sm:$0xff]
    %v97 = vld [vmem:[#allocation6 + $0x68] sm:$0xff]
    %v98 = vld [vmem:[#allocation6 + $0x70] sm:$0xff]
    %v99 = vld [vmem:[#allocation6 + $0x78] sm:$0xff]
    %v100 = vld [vmem:[%s6] sm:$0x1]
    %v101 = vld [vmem:[#allocation8] sm:$0xff]
    %v102 = vld [vmem:[#allocation8 + $0x8] sm:$0xff]
    %v103 = vld [vmem:[#allocation8 + $0x10] sm:$0xff]
    %v104 = vld [vmem:[#allocation8 + $0x18] sm:$0xff]
    %v105 = vld [vmem:[#allocation8 + $0x20] sm:$0xff]
    %v106 = vld [vmem:[#allocation8 + $0x28] sm:$0xff]
    %v107 = vld [vmem:[#allocation8 + $0x30] sm:$0xff]
    %v108 = vld [vmem:[#allocation8 + $0x38] sm:$0xff]
    %v109 = vld [vmem:[#allocation8 + $0x40] sm:$0xff]
    %v110 = vld [vmem:[#allocation8 + $0x48] sm:$0xff]
    %v111 = vld [vmem:[#allocation8 + $0x50] sm:$0xff]
    %v112 = vld [vmem:[#allocation8 + $0x58] sm:$0xff]
    %v113 = vld [vmem:[#allocation8 + $0x60] sm:$0xff]
    %v114 = vld [vmem:[#allocation8 + $0x68] sm:$0xff]
    %v115 = vld [vmem:[#allocation8 + $0x70] sm:$0xff]
    %v116 = vld [vmem:[#allocation8 + $0x78] sm:$0xff]
    %117 = vmatpush.msra.mxu0 %v116
    %118 = vmatpush.msra.mxu0 %v115
    %119 = vmatpush.msra.mxu0 %v114
    %120 = vmatpush.msra.mxu0 %v113
    %121 = vmatpush.msra.mxu0 %v112
    %122 = vmatpush.msra.mxu0 %v111
    %123 = vmatpush.msra.mxu0 %v110
    %124 = vmatpush.msra.mxu0 %v109
    %125 = vmatpush.msra.mxu0 %v108
    %126 = vmatpush.msra.mxu0 %v107
    %127 = vmatpush.msra.mxu0 %v106
    %128 = vmatpush.msra.mxu0 %v105
    %129 = vmatpush.msra.mxu0 %v104
    %130 = vmatpush.msra.mxu0 %v103
    %131 = vmatpush.msra.mxu0 %v102
    %132 = vmatpush.msra.mxu0 %v101
    %133 = vmatmul.f32.gmra.mxu0 %v82
    %v134 = vpop.f32.mrf.mxu0
    %v135 = vadd.f32 0.0, %v134
    %136 = vdwg.mxu0
    %v138 = vperm.slane %v100, 0
    %v140 = vmul.f32 %v138, %v135
    %141 = vmatpush.msra.mxu0 %v99
    %142 = vmatpush.msra.mxu0 %v98
    %143 = vmatpush.msra.mxu0 %v97
    %144 = vmatpush.msra.mxu0 %v96
    %145 = vmatpush.msra.mxu0 %v95
    %146 = vmatpush.msra.mxu0 %v94
    %147 = vmatpush.msra.mxu0 %v93
    %148 = vmatpush.msra.mxu0 %v92
    %149 = vmatpush.msra.mxu0 %v91
    %150 = vmatpush.msra.mxu0 %v90
    %151 = vmatpush.msra.mxu0 %v89
    %152 = vmatpush.msra.mxu0 %v88
    %153 = vmatpush.msra.mxu0 %v87
    %154 = vmatpush.msra.mxu0 %v86
    %155 = vmatpush.msra.mxu0 %v85
    %156 = vmatpush.msra.mxu0 %v84
    %157 = vmatmul.f32.gmra.mxu0 %v77
    %v158 = vpop.f32.mrf.mxu0
    %v159 = vadd.f32 %v140, %v158
    %160 = vdwg.mxu0
    %v161 = vadd.f32 %v83, %v159
    %162 = vst [vmem:[#allocation2] sm:$0xff] %v161
    // Predicated region
    $region46: #{tpu_custom_call.1} parent=1 // pred_check
      %p163 = pneg %p72
    $region47: #{tpu_custom_call.1} parent=1 // pred_check_branch
      %165 = sbr.rel (%p163) target = $region49
    $region48: #{tpu_custom_call.1} parent=1 // pred_region
      %v166 = vld [vmem:[%s3] sm:$0x1]
      %v167 = vld [vmem:[%s4] sm:$0x1]
      %v168 = vld [vmem:[%s6] sm:$0x1]
      %v169 = vmul.f32 %v167, %v168
      %v170 = vadd.f32 %v166, %v169
      %v171 = vld [vmem:[#allocation2] sm:$0xff]
      %v173 = vperm.slane %v170, 0
      %v175 = vadd.f32 %v171, %v173
      %176 = vst [vmem:[#allocation9] sm:$0xff] %v175
    $region49: #{tpu_custom_call.1} parent=1 // pred_fallthru
      _
    // Predicated region
    $region50: #{tpu_custom_call.1} parent=1 // pred_check
      _
    $region51: #{tpu_custom_call.1} parent=1 // pred_check_branch
      %178 = sbr.rel (0) target = $region53
    $region52: #{tpu_custom_call.1} parent=1 // pred_region
      %180 = vsyncadd [#allocation5], 0
      %s182 = sshll.u32 [#allocation9], 4
      %s183 = int_to_ptr.vmem [resolvable:$true] %s182
      %s184 = sshll.u32 %s7, 4
      %s185 = int_to_ptr.hbm [resolvable:$true] %s184
      %187 = dma.vmem_to_hbm [thread:$0]  %s183, 128, %s185, [#allocation5]
    $region53: #{tpu_custom_call.1} parent=1 // pred_fallthru
      _
    // Predicated region
    $region54: #{tpu_custom_call.1} parent=1 // pred_check
      _
    $region55: #{tpu_custom_call.1} parent=1 // pred_check_branch
      %189 = sbr.rel (0) target = $region57
    $region56: #{tpu_custom_call.1} parent=1 // pred_region
      %191 = dma.done [#allocation5], 128
    $region57: #{tpu_custom_call.1} parent=1 // pred_fallthru
      _
    %192 = vsyncpa [#allocation4], 1
    %193 = vsyncpa [#allocation7], 1
    %194 = vsyncpa [#allocation5], 1

</llo_original>
